<compile_context>
chip_gen: v7x
topology: tpu7x:2x2x1
jax: 0.10.0
libtpu: 0.0.40
codegen_flags: <defaults>
</compile_context>

<pallas_src>
import jax
import jax.numpy as jnp
from jax import lax
from jax.experimental import pallas as pl
from jax.experimental.pallas import tpu as pltpu


def _dist_corr_kernel(x_ref, f_ref, o_ref, g_acc):
    # x_ref: (n, tk) f32 tile of the flattened data
    # f_ref: (n, dF) f32 full feature matrix (resident)
    # o_ref: (1, 1)  f32 scalar output in SMEM
    # g_acc: (n, n)  f32 VMEM Gram accumulator (persists across grid steps)
    k = pl.program_id(0)
    nk = pl.num_programs(0)

    @pl.when(k == 0)
    def _init():
        g_acc[...] = jnp.zeros_like(g_acc)

    xt = x_ref[...]
    # Contract last dims of both operands: X @ X^T without materializing X^T.
    g_acc[...] += lax.dot_general(
        xt, xt,
        dimension_numbers=(((1,), (1,)), ((), ())),
        preferred_element_type=jnp.float32,
    )

    @pl.when(k == nk - 1)
    def _epilogue():
        G = g_acc[...]
        n = G.shape[0]
        inv_n2 = 1.0 / float(n * n)

        row_i = lax.broadcasted_iota(jnp.int32, (n, n), 0)
        col_i = lax.broadcasted_iota(jnp.int32, (n, n), 1)
        eye = row_i == col_i

        def dist_from_gram(Gm):
            # squared row norms from the Gram diagonal (no extra pass over X)
            r = jnp.sum(jnp.where(eye, Gm, jnp.float32(0.0)), axis=1,
                        keepdims=True)                       # (n, 1)
            d2 = jnp.maximum(r - 2.0 * Gm + r.T, jnp.float32(1e-07))
            return jnp.sqrt(d2)

        def double_center(M):
            # M is symmetric: col mean == row mean^T, total mean == mean(row means)
            row_mean = jnp.mean(M, axis=1, keepdims=True)    # (n, 1)
            tot_mean = jnp.mean(row_mean)
            return M - row_mean - row_mean.T + tot_mean

        # data-branch distances from accumulated Gram
        a = dist_from_gram(G)

        # feature branch: small, computed entirely in the epilogue
        fm = f_ref[...]
        Gf = lax.dot_general(
            fm, fm,
            dimension_numbers=(((1,), (1,)), ((), ())),
            preferred_element_type=jnp.float32,
        )
        b = dist_from_gram(Gf)

        A = double_center(a)
        B = double_center(b)

        # fused final reductions (A, B read once each as live values)
        sAB = jnp.sum(A * B)
        sAA = jnp.sum(A * A)
        sBB = jnp.sum(B * B)

        dCovXY = jnp.sqrt(sAB * inv_n2 + 1e-07)
        dVarXX = jnp.sqrt(sAA * inv_n2 + 1e-07)
        dVarYY = jnp.sqrt(sBB * inv_n2 + 1e-07)
        dCorXY = dCovXY / (jnp.sqrt(dVarXX + 1e-07) * jnp.sqrt(dVarYY + 1e-07))

        o_ref[0, 0] = dCorXY


def corelation_forward(data, feature):
    """Mirrors Corelation.forward: dist_corr(data.reshape(n,-1), feature.reshape(n,-1))."""
    n = data.shape[0]
    X = data.reshape(n, -1).astype(jnp.float32)
    Fm = feature.reshape(n, -1).astype(jnp.float32)
    dX = X.shape[1]
    dF = Fm.shape[1]

    # ---- K-tile sizing: keep double-buffered X tiles within a modest budget ----
    per_buf_cap = 4 << 20                                   # 4 MiB per X buffer
    tk_cap = max(128, ((per_buf_cap // (n * 4)) // 128) * 128)
    tk = min(tk_cap, pl.cdiv(dX, 128) * 128)
    d_pad = pl.cdiv(dX, tk) * tk
    if d_pad != dX:
        # zero padding is exact for Gram / squared norms
        X = jnp.pad(X, ((0, 0), (0, d_pad - dX)))
    nk = d_pad // tk

    # explicit VMEM budget (works within v7x 64 MiB / v5e 16 MiB-default limits)
    vmem_est = (2 * n * tk * 4) + (2 * n * dF * 4) + (n * n * 4 * 8) + (2 << 20)
    vmem_limit = int(min(max(vmem_est, 16 << 20), 48 << 20))

    out = pl.pallas_call(
        _dist_corr_kernel,
        out_shape=jax.ShapeDtypeStruct((1, 1), jnp.float32),
        grid_spec=pltpu.PrefetchScalarGridSpec(
            num_scalar_prefetch=0,
            grid=(nk,),
            in_specs=[
                pl.BlockSpec((n, tk), lambda k: (0, k)),     # streamed X tiles
                pl.BlockSpec((n, dF), lambda k: (0, 0)),     # resident feature
            ],
            out_specs=pl.BlockSpec(memory_space=pltpu.MemorySpace.SMEM),
            scratch_shapes=[pltpu.VMEM((n, n), jnp.float32)],
        ),
        compiler_params=pltpu.CompilerParams(
            dimension_semantics=("arbitrary",),              # K is a reduction axis
            vmem_limit_bytes=vmem_limit,
        ),
    )(X, Fm)
    return out[0, 0]


def _reference(data, feature):
    # Pure-JAX reference, same math as the PyTorch module.
    n = data.shape[0]
    X = data.reshape(n, -1).astype(jnp.float32)
    Fm = feature.reshape(n, -1).astype(jnp.float32)

    def pdist(A):
        r = jnp.sum(A * A, axis=1, keepdims=True)
        D2 = jnp.maximum(r - 2.0 * A @ A.T + r.T, 1e-07)
        return jnp.sqrt(D2)

    def center(M):
        return M - jnp.mean(M, 1, keepdims=True) - jnp.mean(M, 0, keepdims=True) + jnp.mean(M)

    a, b = pdist(X), pdist(Fm)
    A, B = center(a), center(b)
    n2 = n * n
    dCov = jnp.sqrt(jnp.sum(A * B) / n2 + 1e-07)
    dVx = jnp.sqrt(jnp.sum(A * A) / n2 + 1e-07)
    dVy = jnp.sqrt(jnp.sum(B * B) / n2 + 1e-07)
    return dCov / (jnp.sqrt(dVx + 1e-07) * jnp.sqrt(dVy + 1e-07))


if __name__ == "__main__":
    key = jax.random.PRNGKey(0)
    k1, k2 = jax.random.split(key)

    # data: NCHW batch of images; feature: per-sample intermediate features.
    data = jax.random.normal(k1, (8, 4, 16, 16), dtype=jnp.float32)
    feature = jax.random.normal(k2, (8, 32), dtype=jnp.float32)

    loss = corelation_forward(data, feature)
    loss = jax.block_until_ready(loss)

    ref = _reference(data, feature)
    assert jnp.allclose(loss, ref, rtol=1e-4, atol=1e-4), (loss, ref)

    print("KERNEL_OK")
</pallas_src>

<mosaic_0001>
module attributes {stable_mosaic.version = 11 : i64} {
  func.func @_dist_corr_kernel(%arg0: i32, %arg1: memref<8x1024xf32, #tpu.memory_space<vmem>>, %arg2: memref<8x32xf32, #tpu.memory_space<vmem>>, %arg3: memref<1x1xf32, #tpu.memory_space<smem>>, %arg4: memref<8x8xf32, #tpu.memory_space<vmem>>) attributes {dimension_semantics = [#tpu.dimension_semantics<arbitrary>], iteration_bounds = array<i64: 1>, scalar_prefetch = 0 : i64, scratch_operands = 1 : i64, tpu.core_type = #tpu.core_type<tc>, window_params = [{transform_indices = @transform_0, window_bounds = array<i64: 8, 1024>}, {pipeline_mode = #tpu.pipeline_mode<synchronous>, transform_indices = @transform_1, window_bounds = array<i64: 8, 32>}, {transform_indices = @transform_2, window_bounds = array<i64: 1, 1>}]} {
    %c0_i32 = arith.constant 0 : i32
    %0 = arith.cmpi eq, %arg0, %c0_i32 : i32
    %1 = arith.extui %0 : i1 to i32
    %c0_i32_0 = arith.constant 0 : i32
    %2 = arith.cmpi ne, %1, %c0_i32_0 : i32
    scf.if %2 {
      %cst_8 = arith.constant 0.000000e+00 : f32
      %11 = vector.broadcast %cst_8 : f32 to vector<8x8xf32>
      %c0_9 = arith.constant 0 : index
      %c0_10 = arith.constant 0 : index
      %12 = vector.load %arg4[%c0_9, %c0_10] : memref<8x8xf32, #tpu.memory_space<vmem>>, vector<8x8xf32>
      tpu.vector_store %arg4[%c0_9, %c0_10], %11 {strides = array<i32>} : memref<8x8xf32, #tpu.memory_space<vmem>>, vector<8x8xf32>,
    } else {
    }
    %c0 = arith.constant 0 : index
    %c0_1 = arith.constant 0 : index
    %3 = vector.load %arg1[%c0, %c0_1] : memref<8x1024xf32, #tpu.memory_space<vmem>>, vector<8x1024xf32>
    %c0_2 = arith.constant 0 : index
    %c0_3 = arith.constant 0 : index
    %4 = vector.load %arg4[%c0_2, %c0_3] : memref<8x8xf32, #tpu.memory_space<vmem>>, vector<8x8xf32>
    %cst = arith.constant dense<0.000000e+00> : vector<8x8xf32>
    %5 = tpu.matmul %3, %3, %cst {dimension_numbers = #tpu.dot_dimension_numbers<[1], [1], [0], [0], [0, 0, 1, 0], [], []>} : vector<8x1024xf32>, vector<8x1024xf32>, vector<8x8xf32> -> vector<8x8xf32>
    %6 = arith.addf %4, %5 : vector<8x8xf32>
    %c0_4 = arith.constant 0 : index
    %c0_5 = arith.constant 0 : index
    %7 = vector.load %arg4[%c0_4, %c0_5] : memref<8x8xf32, #tpu.memory_space<vmem>>, vector<8x8xf32>
    tpu.vector_store %arg4[%c0_4, %c0_5], %6 {strides = array<i32>} : memref<8x8xf32, #tpu.memory_space<vmem>>, vector<8x8xf32>,
    %c0_i32_6 = arith.constant 0 : i32
    %8 = arith.cmpi eq, %arg0, %c0_i32_6 : i32
    %9 = arith.extui %8 : i1 to i32
    %c0_i32_7 = arith.constant 0 : i32
    %10 = arith.cmpi ne, %9, %c0_i32_7 : i32
    scf.if %10 {
      %c0_8 = arith.constant 0 : index
      %c0_9 = arith.constant 0 : index
      %11 = vector.load %arg4[%c0_8, %c0_9] : memref<8x8xf32, #tpu.memory_space<vmem>>, vector<8x8xf32>
      %12 = tpu.iota {dimensions = array<i32: 0>} : vector<8x8xi32>
      %13 = tpu.iota {dimensions = array<i32: 1>} : vector<8x8xi32>
      %14 = arith.cmpi eq, %12, %13 : vector<8x8xi32>
      %cst_10 = arith.constant 0.000000e+00 : f32
      %15 = vector.broadcast %cst_10 : f32 to vector<8x8xf32>
      %16 = arith.select %14, %11, %15 : vector<8x8xi1>, vector<8x8xf32>
      %cst_11 = arith.constant dense<0.000000e+00> : vector<8xf32>
      %17 = vector.multi_reduction <add>, %16, %cst_11 [1] : vector<8x8xf32> to vector<8xf32>
      %18 = vector.shape_cast %17 : vector<8xf32> to vector<8x1xf32>
      %cst_12 = arith.constant 2.000000e+00 : f32
      %19 = vector.broadcast %cst_12 : f32 to vector<8x8xf32>
      %20 = arith.mulf %19, %11 : vector<8x8xf32>
      %21 = vector.broadcast %18 : vector<8x1xf32> to vector<8x8xf32>
      %22 = arith.subf %21, %20 : vector<8x8xf32>
      %23 = tpu.transpose %18, [1, 0] : vector<8x1xf32> -> vector<1x8xf32>
      %24 = vector.broadcast %23 : vector<1x8xf32> to vector<8x8xf32>
      %25 = arith.addf %22, %24 : vector<8x8xf32>
      %cst_13 = arith.constant 1.000000e-07 : f32
      %26 = vector.broadcast %cst_13 : f32 to vector<8x8xf32>
      %27 = arith.maximumf %25, %26 : vector<8x8xf32>
      %28 = math.sqrt %27 : vector<8x8xf32>
      %c0_14 = arith.constant 0 : index
      %c0_15 = arith.constant 0 : index
      %29 = vector.load %arg2[%c0_14, %c0_15] : memref<8x32xf32, #tpu.memory_space<vmem>>, vector<8x32xf32>
      %cst_16 = arith.constant dense<0.000000e+00> : vector<8x8xf32>
      %30 = tpu.matmul %29, %29, %cst_16 {dimension_numbers = #tpu.dot_dimension_numbers<[1], [1], [0], [0], [0, 0, 1, 0], [], []>} : vector<8x32xf32>, vector<8x32xf32>, vector<8x8xf32> -> vector<8x8xf32>
      %cst_17 = arith.constant 0.000000e+00 : f32
      %31 = vector.broadcast %cst_17 : f32 to vector<8x8xf32>
      %32 = arith.select %14, %30, %31 : vector<8x8xi1>, vector<8x8xf32>
      %cst_18 = arith.constant dense<0.000000e+00> : vector<8xf32>
      %33 = vector.multi_reduction <add>, %32, %cst_18 [1] : vector<8x8xf32> to vector<8xf32>
      %34 = vector.shape_cast %33 : vector<8xf32> to vector<8x1xf32>
      %cst_19 = arith.constant 2.000000e+00 : f32
      %35 = vector.broadcast %cst_19 : f32 to vector<8x8xf32>
      %36 = arith.mulf %35, %30 : vector<8x8xf32>
      %37 = vector.broadcast %34 : vector<8x1xf32> to vector<8x8xf32>
      %38 = arith.subf %37, %36 : vector<8x8xf32>
      %39 = tpu.transpose %34, [1, 0] : vector<8x1xf32> -> vector<1x8xf32>
      %40 = vector.broadcast %39 : vector<1x8xf32> to vector<8x8xf32>
      %41 = arith.addf %38, %40 : vector<8x8xf32>
      %cst_20 = arith.constant 1.000000e-07 : f32
      %42 = vector.broadcast %cst_20 : f32 to vector<8x8xf32>
      %43 = arith.maximumf %41, %42 : vector<8x8xf32>
      %44 = math.sqrt %43 : vector<8x8xf32>
      %cst_21 = arith.constant dense<0.000000e+00> : vector<8xf32>
      %45 = vector.multi_reduction <add>, %28, %cst_21 [1] : vector<8x8xf32> to vector<8xf32>
      %46 = vector.shape_cast %45 : vector<8xf32> to vector<8x1xf32>
      %cst_22 = arith.constant 8.000000e+00 : f32
      %47 = vector.broadcast %cst_22 : f32 to vector<8x1xf32>
      %48 = arith.divf %46, %47 : vector<8x1xf32>
      %49 = vector.shape_cast %48 : vector<8x1xf32> to vector<1x8x1xf32>
      %cst_23 = arith.constant dense<0.000000e+00> : vector<1xf32>
      %50 = vector.multi_reduction <add>, %49, %cst_23 [1, 2] : vector<1x8x1xf32> to vector<1xf32>
      %51 = vector.shape_cast %50 : vector<1xf32> to vector<1x1x1xf32>
      %52 = vector.extract %51[0, 0, 0] : f32 from vector<1x1x1xf32>
      %cst_24 = arith.constant 8.000000e+00 : f32
      %53 = arith.divf %52, %cst_24 : f32
      %54 = vector.broadcast %48 : vector<8x1xf32> to vector<8x8xf32>
      %55 = arith.subf %28, %54 : vector<8x8xf32>
      %56 = tpu.transpose %48, [1, 0] : vector<8x1xf32> -> vector<1x8xf32>
      %57 = vector.broadcast %56 : vector<1x8xf32> to vector<8x8xf32>
      %58 = arith.subf %55, %57 : vector<8x8xf32>
      %59 = vector.broadcast %53 : f32 to vector<8x8xf32>
      %60 = arith.addf %58, %59 : vector<8x8xf32>
      %cst_25 = arith.constant dense<0.000000e+00> : vector<8xf32>
      %61 = vector.multi_reduction <add>, %44, %cst_25 [1] : vector<8x8xf32> to vector<8xf32>
      %62 = vector.shape_cast %61 : vector<8xf32> to vector<8x1xf32>
      %cst_26 = arith.constant 8.000000e+00 : f32
      %63 = vector.broadcast %cst_26 : f32 to vector<8x1xf32>
      %64 = arith.divf %62, %63 : vector<8x1xf32>
      %65 = vector.shape_cast %64 : vector<8x1xf32> to vector<1x8x1xf32>
      %cst_27 = arith.constant dense<0.000000e+00> : vector<1xf32>
      %66 = vector.multi_reduction <add>, %65, %cst_27 [1, 2] : vector<1x8x1xf32> to vector<1xf32>
      %67 = vector.shape_cast %66 : vector<1xf32> to vector<1x1x1xf32>
      %68 = vector.extract %67[0, 0, 0] : f32 from vector<1x1x1xf32>
      %cst_28 = arith.constant 8.000000e+00 : f32
      %69 = arith.divf %68, %cst_28 : f32
      %70 = vector.broadcast %64 : vector<8x1xf32> to vector<8x8xf32>
      %71 = arith.subf %44, %70 : vector<8x8xf32>
      %72 = tpu.transpose %64, [1, 0] : vector<8x1xf32> -> vector<1x8xf32>
      %73 = vector.broadcast %72 : vector<1x8xf32> to vector<8x8xf32>
      %74 = arith.subf %71, %73 : vector<8x8xf32>
      %75 = vector.broadcast %69 : f32 to vector<8x8xf32>
      %76 = arith.addf %74, %75 : vector<8x8xf32>
      %77 = arith.mulf %60, %76 : vector<8x8xf32>
      %78 = vector.shape_cast %77 : vector<8x8xf32> to vector<1x8x8xf32>
      %cst_29 = arith.constant dense<0.000000e+00> : vector<1xf32>
      %79 = vector.multi_reduction <add>, %78, %cst_29 [1, 2] : vector<1x8x8xf32> to vector<1xf32>
      %80 = vector.shape_cast %79 : vector<1xf32> to vector<1x1x1xf32>
      %81 = vector.extract %80[0, 0, 0] : f32 from vector<1x1x1xf32>
      %82 = arith.mulf %60, %60 : vector<8x8xf32>
      %83 = vector.shape_cast %82 : vector<8x8xf32> to vector<1x8x8xf32>
      %cst_30 = arith.constant dense<0.000000e+00> : vector<1xf32>
      %84 = vector.multi_reduction <add>, %83, %cst_30 [1, 2] : vector<1x8x8xf32> to vector<1xf32>
      %85 = vector.shape_cast %84 : vector<1xf32> to vector<1x1x1xf32>
      %86 = vector.extract %85[0, 0, 0] : f32 from vector<1x1x1xf32>
      %87 = arith.mulf %76, %76 : vector<8x8xf32>
      %88 = vector.shape_cast %87 : vector<8x8xf32> to vector<1x8x8xf32>
      %cst_31 = arith.constant dense<0.000000e+00> : vector<1xf32>
      %89 = vector.multi_reduction <add>, %88, %cst_31 [1, 2] : vector<1x8x8xf32> to vector<1xf32>
      %90 = vector.shape_cast %89 : vector<1xf32> to vector<1x1x1xf32>
      %91 = vector.extract %90[0, 0, 0] : f32 from vector<1x1x1xf32>
      %cst_32 = arith.constant 1.562500e-02 : f32
      %92 = arith.mulf %81, %cst_32 : f32
      %cst_33 = arith.constant 1.000000e-07 : f32
      %93 = arith.addf %92, %cst_33 : f32
      %94 = math.sqrt %93 : f32
      %cst_34 = arith.constant 1.562500e-02 : f32
      %95 = arith.mulf %86, %cst_34 : f32
      %cst_35 = arith.constant 1.000000e-07 : f32
      %96 = arith.addf %95, %cst_35 : f32
      %97 = math.sqrt %96 : f32
      %cst_36 = arith.constant 1.562500e-02 : f32
      %98 = arith.mulf %91, %cst_36 : f32
      %cst_37 = arith.constant 1.000000e-07 : f32
      %99 = arith.addf %98, %cst_37 : f32
      %100 = math.sqrt %99 : f32
      %cst_38 = arith.constant 1.000000e-07 : f32
      %101 = arith.addf %97, %cst_38 : f32
      %102 = math.sqrt %101 : f32
      %cst_39 = arith.constant 1.000000e-07 : f32
      %103 = arith.addf %100, %cst_39 : f32
      %104 = math.sqrt %103 : f32
      %105 = arith.mulf %102, %104 : f32
      %106 = arith.divf %94, %105 : f32
      %c0_40 = arith.constant 0 : index
      %c0_41 = arith.constant 0 : index
      %107 = memref.load %arg3[%c0_40, %c0_41] : memref<1x1xf32, #tpu.memory_space<smem>>
      memref.store %106, %arg3[%c0_40, %c0_41] : memref<1x1xf32, #tpu.memory_space<smem>>
    } else {
    }
    return
  }
  func.func @transform_0(%arg0: i32) -> (i32, i32) {
    %c0_i32 = arith.constant 0 : i32
    %c0_i32_0 = arith.constant 0 : i32
    return %c0_i32, %arg0 : i32, i32
  }
  func.func @transform_1(%arg0: i32) -> (i32, i32) {
    %c0_i32 = arith.constant 0 : i32
    %c0_i32_0 = arith.constant 0 : i32
    %c0_i32_1 = arith.constant 0 : i32
    return %c0_i32, %c0_i32_0 : i32, i32
  }
  func.func @transform_2(%arg0: i32) -> (i32, i32) {
    %c0_i32 = arith.constant 0 : i32
    %c0_i32_0 = arith.constant 0 : i32
    %c0_i32_1 = arith.constant 0 : i32
    return %c0_i32, %c0_i32_0 : i32, i32
  }
}

</mosaic_0001>

<llo_original>
// kernel: tpu_custom_call.1
$region0: #{tpu_custom_call.1}
  #allocation0 [shape = 'u32[]', space=smem, size = 0x4, offset = 0x4, fixed_abs, tag = 'smem constant byte address 0x4 - core index']
  #allocation1 [shape = 'u32[144,128]{1,0:T(1,128)}', space=vmem, size = 0x12000, scoped, tag = 'internal scratch']
  #allocation2 [shape = 'f32[8,8]{1,0:T(8,128)}', space=vmem, size = 0x1000, scoped, tag = 'scratch operand']
  %s0 = inlined_call_operand.hbm [shape: f32[8,1024], index: 0, kind: input, shape index: {}]
  %s1 = inlined_call_operand.hbm [shape: f32[8,32], index: 1, kind: input, shape index: {}]
  %s2 = inlined_call_operand.hbm [shape: f32[1,1], index: 2, kind: output, shape index: {}]
  %s3 = sld [smem:[#allocation0]]
  $region34: #{tpu_custom_call.1} parent=0
    _
  %s5 = ssub.s32 1, %s3
  %s6 = scalar_select 0, %s5, %s3
  $region1: #{tpu_custom_call.1} parent=0
    #allocation3 [shape = 'u8[32768]{0}', space=vmem, size = 0x8000, scoped, tag = 'input window, operand 0, single buffered']
    #allocation4 [shape = 's32[1]{0}', space=sflag, size = 0x4, scoped, tag = 'scoped memory for tpu_custom_call.1']
    #allocation5 [shape = 's32[1]{0}', space=sflag, size = 0x4, scoped, tag = 'scoped memory for tpu_custom_call.1']
    #allocation6 [shape = 'u8[4096]{0}', space=vmem, size = 0x1000, scoped, tag = 'input window, operand 1, single buffered']
    #allocation7 [shape = 's32[1]{0}', space=sflag, size = 0x4, scoped, tag = 'scoped memory for tpu_custom_call.1']
    #allocation8 [shape = 'u8[512]{0}', space=smem, size = 0x200, scoped, tag = 'output window, operand 0, single buffered']
    %7 = vsyncpa [#allocation4], 0
    %8 = vsyncpa [#allocation7], 0
    %9 = vsyncpa [#allocation5], 0
    // Predicated region
    $region2: #{tpu_custom_call.1} parent=1 // pred_check
      _
    $region3: #{tpu_custom_call.1} parent=1 // pred_check_branch
      %11 = sbr.rel (0) target = $region5
    $region4: #{tpu_custom_call.1} parent=1 // pred_region
      %s13 = ssub.s32 1024, 1024
      %14 = vsyncadd [#allocation4], %s13
      %s16 = sshll.u32 [#allocation3], 4
      %s17 = int_to_ptr.vmem [resolvable:$true] %s16
      %19 = dma.hbm_to_vmem [thread:$0]  %s0, 1024, %s17, [#allocation4]
    $region5: #{tpu_custom_call.1} parent=1 // pred_fallthru
      _
    // Predicated region
    $region6: #{tpu_custom_call.1} parent=1 // pred_check
      _
    $region7: #{tpu_custom_call.1} parent=1 // pred_check_branch
      %21 = sbr.rel (0) target = $region9
    $region8: #{tpu_custom_call.1} parent=1 // pred_region
      %s23 = ssub.s32 128, 128
      %24 = vsyncadd [#allocation7], %s23
      %s26 = sshll.u32 [#allocation6], 4
      %s27 = int_to_ptr.vmem [resolvable:$true] %s26
      %29 = dma.hbm_to_vmem [thread:$0]  %s1, 128, %s27, [#allocation7]
    $region9: #{tpu_custom_call.1} parent=1 // pred_fallthru
      _
    // Predicated region
    $region10: #{tpu_custom_call.1} parent=1 // pred_check
      _
    $region11: #{tpu_custom_call.1} parent=1 // pred_check_branch
      %31 = sbr.rel (0) target = $region13
    $region12: #{tpu_custom_call.1} parent=1 // pred_region
      %32 = dma.done [#allocation4], 1024
    $region13: #{tpu_custom_call.1} parent=1 // pred_fallthru
      _
    // Predicated region
    $region14: #{tpu_custom_call.1} parent=1 // pred_check
      _
    $region15: #{tpu_custom_call.1} parent=1 // pred_check_branch
      %34 = sbr.rel (0) target = $region17
    $region16: #{tpu_custom_call.1} parent=1 // pred_region
      %35 = dma.done [#allocation7], 128
    $region17: #{tpu_custom_call.1} parent=1 // pred_fallthru
      _
    %p36 = scmp.eq.s32.totalorder 0, 0
    // Predicated region
    $region18: #{tpu_custom_call.1} parent=1 // pred_check
      %p37 = pneg %p36
    $region19: #{tpu_custom_call.1} parent=1 // pred_check_branch
      %39 = sbr.rel (%p37) target = $region21
    $region20: #{tpu_custom_call.1} parent=1 // pred_region
      %vm40 = vcmask 64512
      %41 = vst.msk [vmem:[#allocation2] sm:$0xff] %vm40, 0.0
    $region21: #{tpu_custom_call.1} parent=1 // pred_fallthru
      _
    %v42 = vld [vmem:[#allocation3] sm:$0xff]
    %v43 = vld [vmem:[#allocation3 + $0x8] sm:$0xff]
    %v44 = vld [vmem:[#allocation3 + $0x10] sm:$0xff]
    %v45 = vld [vmem:[#allocation3 + $0x18] sm:$0xff]
    %v46 = vld [vmem:[#allocation3 + $0x20] sm:$0xff]
    %v47 = vld [vmem:[#allocation3 + $0x28] sm:$0xff]
    %v48 = vld [vmem:[#allocation3 + $0x30] sm:$0xff]
    %v49 = vld [vmem:[#allocation3 + $0x38] sm:$0xff]
    %v50 = vld [vmem:[#allocation2] sm:$0xff]
    %51 = vmatprep.subr.mxu0 %v43
    %52 = vmatpush1.xpose.msra.mxu0 %v42
    %53 = vmatprep.subr.mxu0 0.0
    %54 = vmatpush1.xpose.msra.mxu0 0.0
    %55 = vmatprep.subr.mxu0 0.0
    %56 = vmatpush1.xpose.msra.mxu0 0.0
    %57 = vmatprep.subr.mxu0 0.0
    %58 = vmatpush1.xpose.msra.mxu0 0.0
    %59 = vmatprep.subr.mxu0 0.0
    %60 = vmatpush1.xpose.msra.mxu0 0.0
    %61 = vmatprep.subr.mxu0 0.0
    %62 = vmatpush1.xpose.msra.mxu0 0.0
    %63 = vmatprep.subr.mxu0 0.0
    %64 = vmatpush1.xpose.msra.mxu0 0.0
    %65 = vmatprep.subr.mxu0 0.0
    %66 = vmatpush1.xpose.msra.mxu0 0.0
    %67 = vmatprep.subr.mxu0 0.0
    %68 = vmatpush1.xpose.msra.mxu0 0.0
    %69 = vmatprep.subr.mxu0 0.0
    %70 = vmatpush1.xpose.msra.mxu0 0.0
    %71 = vmatprep.subr.mxu0 0.0
    %72 = vmatpush1.xpose.msra.mxu0 0.0
    %73 = vmatprep.subr.mxu0 0.0
    %74 = vmatpush1.xpose.msra.mxu0 0.0
    %75 = vmatprep.subr.mxu0 0.0
    %76 = vmatpush1.xpose.msra.mxu0 0.0
    %77 = vmatprep.subr.mxu0 0.0
    %78 = vmatpush1.xpose.msra.mxu0 0.0
    %79 = vmatprep.subr.mxu0 0.0
    %80 = vmatpush1.xpose.msra.mxu0 0.0
    %81 = vmatprep.subr.mxu0 0.0
    %82 = vmatpush1.xpose.msra.mxu0 0.0
    %83 = vmatprep.subr.mxu0 0.0
    %84 = vmatpush1.xpose.msra.mxu0 0.0
    %85 = vmatprep.subr.mxu0 0.0
    %86 = vmatpush1.xpose.msra.mxu0 0.0
    %87 = vmatprep.subr.mxu0 0.0
    %88 = vmatpush1.xpose.msra.mxu0 0.0
    %89 = vmatprep.subr.mxu0 0.0
    %90 = vmatpush1.xpose.msra.mxu0 0.0
    %91 = vmatprep.subr.mxu0 0.0
    %92 = vmatpush1.xpose.msra.mxu0 0.0
    %93 = vmatprep.subr.mxu0 0.0
    %94 = vmatpush1.xpose.msra.mxu0 0.0
    %95 = vmatprep.subr.mxu0 0.0
    %96 = vmatpush1.xpose.msra.mxu0 0.0
    %97 = vmatprep.subr.mxu0 0.0
    %98 = vmatpush1.xpose.msra.mxu0 0.0
    %99 = vmatprep.subr.mxu0 0.0
    %100 = vmatpush1.xpose.msra.mxu0 0.0
    %101 = vmatprep.subr.mxu0 0.0
    %102 = vmatpush1.xpose.msra.mxu0 0.0
    %103 = vmatprep.subr.mxu0 0.0
    %104 = vmatpush1.xpose.msra.mxu0 0.0
    %105 = vmatprep.subr.mxu0 0.0
    %106 = vmatpush1.xpose.msra.mxu0 0.0
    %107 = vmatprep.subr.mxu0 0.0
    %108 = vmatpush1.xpose.msra.mxu0 0.0
    %109 = vmatprep.subr.mxu0 0.0
    %110 = vmatpush1.xpose.msra.mxu0 0.0
    %111 = vmatprep.subr.mxu0 0.0
    %112 = vmatpush1.xpose.msra.mxu0 0.0
    %113 = vmatprep.subr.mxu0 0.0
    %114 = vmatpush1.xpose.msra.mxu0 0.0
    %115 = vmatprep.mubr.f32.mxu0 %v43
    %116 = vmatmul.mubr.f32.gmra.mrb[0].mxu0 %v42
    %v117 = vpop.f32.mrb[0].mxu0
    %v118 = vadd.f32 0.0, %v117
    %v119 = vpop.f32.mrb[0].mxu0
    %120 = vdwg.mxu0
    %121 = vmatprep.subr.mxu0 %v45
    %122 = vmatpush1.xpose.msra.mxu0 %v44
    %123 = vmatprep.subr.mxu0 0.0
    %124 = vmatpush1.xpose.msra.mxu0 0.0
    %125 = vmatprep.subr.mxu0 0.0
    %126 = vmatpush1.xpose.msra.mxu0 0.0
    %127 = vmatprep.subr.mxu0 0.0
    %128 = vmatpush1.xpose.msra.mxu0 0.0
    %129 = vmatprep.subr.mxu0 0.0
    %130 = vmatpush1.xpose.msra.mxu0 0.0
    %131 = vmatprep.subr.mxu0 0.0
    %132 = vmatpush1.xpose.msra.mxu0 0.0
    %133 = vmatprep.subr.mxu0 0.0
    %134 = vmatpush1.xpose.msra.mxu0 0.0
    %135 = vmatprep.subr.mxu0 0.0
    %136 = vmatpush1.xpose.msra.mxu0 0.0
    %137 = vmatprep.subr.mxu0 0.0
    %138 = vmatpush1.xpose.msra.mxu0 0.0
    %139 = vmatprep.subr.mxu0 0.0
    %140 = vmatpush1.xpose.msra.mxu0 0.0
    %141 = vmatprep.subr.mxu0 0.0
    %142 = vmatpush1.xpose.msra.mxu0 0.0
    %143 = vmatprep.subr.mxu0 0.0
    %144 = vmatpush1.xpose.msra.mxu0 0.0
    %145 = vmatprep.subr.mxu0 0.0
    %146 = vmatpush1.xpose.msra.mxu0 0.0
    %147 = vmatprep.subr.mxu0 0.0
    %148 = vmatpush1.xpose.msra.mxu0 0.0
    %149 = vmatprep.subr.mxu0 0.0
    %150 = vmatpush1.xpose.msra.mxu0 0.0
    %151 = vmatprep.subr.mxu0 0.0
    %152 = vmatpush1.xpose.msra.mxu0 0.0
    %153 = vmatprep.subr.mxu0 0.0
    %154 = vmatpush1.xpose.msra.mxu0 0.0
    %155 = vmatprep.subr.mxu0 0.0
    %156 = vmatpush1.xpose.msra.mxu0 0.0
    %157 = vmatprep.subr.mxu0 0.0
    %158 = vmatpush1.xpose.msra.mxu0 0.0
    %159 = vmatprep.subr.mxu0 0.0
    %160 = vmatpush1.xpose.msra.mxu0 0.0
    %161 = vmatprep.subr.mxu0 0.0
    %162 = vmatpush1.xpose.msra.mxu0 0.0
    %163 = vmatprep.subr.mxu0 0.0
    %164 = vmatpush1.xpose.msra.mxu0 0.0
    %165 = vmatprep.subr.mxu0 0.0
    %166 = vmatpush1.xpose.msra.mxu0 0.0
    %167 = vmatprep.subr.mxu0 0.0
    %168 = vmatpush1.xpose.msra.mxu0 0.0
    %169 = vmatprep.subr.mxu0 0.0
    %170 = vmatpush1.xpose.msra.mxu0 0.0
    %171 = vmatprep.subr.mxu0 0.0
    %172 = vmatpush1.xpose.msra.mxu0 0.0
    %173 = vmatprep.subr.mxu0 0.0
    %174 = vmatpush1.xpose.msra.mxu0 0.0
    %175 = vmatprep.subr.mxu0 0.0
    %176 = vmatpush1.xpose.msra.mxu0 0.0
    %177 = vmatprep.subr.mxu0 0.0
    %178 = vmatpush1.xpose.msra.mxu0 0.0
    %179 = vmatprep.subr.mxu0 0.0
    %180 = vmatpush1.xpose.msra.mxu0 0.0
    %181 = vmatprep.subr.mxu0 0.0
    %182 = vmatpush1.xpose.msra.mxu0 0.0
    %183 = vmatprep.subr.mxu0 0.0
    %184 = vmatpush1.xpose.msra.mxu0 0.0
    %185 = vmatprep.mubr.f32.mxu0 %v45
    %186 = vmatmul.mubr.f32.gmra.mrb[0].mxu0 %v44
    %v187 = vpop.f32.mrb[0].mxu0
    %v188 = vadd.f32 %v118, %v187
    %v189 = vpop.f32.mrb[0].mxu0
    %190 = vdwg.mxu0
    %191 = vmatprep.subr.mxu0 %v47
    %192 = vmatpush1.xpose.msra.mxu0 %v46
    %193 = vmatprep.subr.mxu0 0.0
    %194 = vmatpush1.xpose.msra.mxu0 0.0
    %195 = vmatprep.subr.mxu0 0.0
    %196 = vmatpush1.xpose.msra.mxu0 0.0
    %197 = vmatprep.subr.mxu0 0.0
    %198 = vmatpush1.xpose.msra.mxu0 0.0
    %199 = vmatprep.subr.mxu0 0.0
    %200 = vmatpush1.xpose.msra.mxu0 0.0
    %201 = vmatprep.subr.mxu0 0.0
    %202 = vmatpush1.xpose.msra.mxu0 0.0
    %203 = vmatprep.subr.mxu0 0.0
    %204 = vmatpush1.xpose.msra.mxu0 0.0
    %205 = vmatprep.subr.mxu0 0.0
    %206 = vmatpush1.xpose.msra.mxu0 0.0
    %207 = vmatprep.subr.mxu0 0.0
    %208 = vmatpush1.xpose.msra.mxu0 0.0
    %209 = vmatprep.subr.mxu0 0.0
    %210 = vmatpush1.xpose.msra.mxu0 0.0
    %211 = vmatprep.subr.mxu0 0.0
    %212 = vmatpush1.xpose.msra.mxu0 0.0
    %213 = vmatprep.subr.mxu0 0.0
    %214 = vmatpush1.xpose.msra.mxu0 0.0
    %215 = vmatprep.subr.mxu0 0.0
    %216 = vmatpush1.xpose.msra.mxu0 0.0
    %217 = vmatprep.subr.mxu0 0.0
    %218 = vmatpush1.xpose.msra.mxu0 0.0
    %219 = vmatprep.subr.mxu0 0.0
    %220 = vmatpush1.xpose.msra.mxu0 0.0
    %221 = vmatprep.subr.mxu0 0.0
    %222 = vmatpush1.xpose.msra.mxu0 0.0
    %223 = vmatprep.subr.mxu0 0.0
    %224 = vmatpush1.xpose.msra.mxu0 0.0
    %225 = vmatprep.subr.mxu0 0.0
    %226 = vmatpush1.xpose.msra.mxu0 0.0
    %227 = vmatprep.subr.mxu0 0.0
    %228 = vmatpush1.xpose.msra.mxu0 0.0
    %229 = vmatprep.subr.mxu0 0.0
    %230 = vmatpush1.xpose.msra.mxu0 0.0
    %231 = vmatprep.subr.mxu0 0.0
    %232 = vmatpush1.xpose.msra.mxu0 0.0
    %233 = vmatprep.subr.mxu0 0.0
    %234 = vmatpush1.xpose.msra.mxu0 0.0
    %235 = vmatprep.subr.mxu0 0.0
    %236 = vmatpush1.xpose.msra.mxu0 0.0
    %237 = vmatprep.subr.mxu0 0.0
    %238 = vmatpush1.xpose.msra.mxu0 0.0
    %239 = vmatprep.subr.mxu0 0.0
    %240 = vmatpush1.xpose.msra.mxu0 0.0
    %241 = vmatprep.subr.mxu0 0.0
    %242 = vmatpush1.xpose.msra.mxu0 0.0
    %243 = vmatprep.subr.mxu0 0.0
    %244 = vmatpush1.xpose.msra.mxu0 0.0
    %245 = vmatprep.subr.mxu0 0.0
    %246 = vmatpush1.xpose.msra.mxu0 0.0
    %247 = vmatprep.subr.mxu0 0.0
    %248 = vmatpush1.xpose.msra.mxu0 0.0
    %249 = vmatprep.subr.mxu0 0.0
    %250 = vmatpush1.xpose.msra.mxu0 0.0
    %251 = vmatprep.subr.mxu0 0.0
    %252 = vmatpush1.xpose.msra.mxu0 0.0
    %253 = vmatprep.subr.mxu0 0.0
    %254 = vmatpush1.xpose.msra.mxu0 0.0
    %255 = vmatprep.mubr.f32.mxu0 %v47
    %256 = vmatmul.mubr.f32.gmra.mrb[0].mxu0 %v46
    %v257 = vpop.f32.mrb[0].mxu0
    %v258 = vadd.f32 %v188, %v257
    %v259 = vpop.f32.mrb[0].mxu0
    %260 = vdwg.mxu0
    %261 = vmatprep.subr.mxu0 %v49
    %262 = vmatpush1.xpose.msra.mxu0 %v48
    %263 = vmatprep.subr.mxu0 0.0
    %264 = vmatpush1.xpose.msra.mxu0 0.0
    %265 = vmatprep.subr.mxu0 0.0
    %266 = vmatpush1.xpose.msra.mxu0 0.0
    %267 = vmatprep.subr.mxu0 0.0
    %268 = vmatpush1.xpose.msra.mxu0 0.0
    %269 = vmatprep.subr.mxu0 0.0
    %270 = vmatpush1.xpose.msra.mxu0 0.0
    %271 = vmatprep.subr.mxu0 0.0
    %272 = vmatpush1.xpose.msra.mxu0 0.0
    %273 = vmatprep.subr.mxu0 0.0
    %274 = vmatpush1.xpose.msra.mxu0 0.0
    %275 = vmatprep.subr.mxu0 0.0
    %276 = vmatpush1.xpose.msra.mxu0 0.0
    %277 = vmatprep.subr.mxu0 0.0
    %278 = vmatpush1.xpose.msra.mxu0 0.0
    %279 = vmatprep.subr.mxu0 0.0
    %280 = vmatpush1.xpose.msra.mxu0 0.0
    %281 = vmatprep.subr.mxu0 0.0
    %282 = vmatpush1.xpose.msra.mxu0 0.0
    %283 = vmatprep.subr.mxu0 0.0
    %284 = vmatpush1.xpose.msra.mxu0 0.0
    %285 = vmatprep.subr.mxu0 0.0
    %286 = vmatpush1.xpose.msra.mxu0 0.0
    %287 = vmatprep.subr.mxu0 0.0
    %288 = vmatpush1.xpose.msra.mxu0 0.0
    %289 = vmatprep.subr.mxu0 0.0
    %290 = vmatpush1.xpose.msra.mxu0 0.0
    %291 = vmatprep.subr.mxu0 0.0
    %292 = vmatpush1.xpose.msra.mxu0 0.0
    %293 = vmatprep.subr.mxu0 0.0
    %294 = vmatpush1.xpose.msra.mxu0 0.0
    %295 = vmatprep.subr.mxu0 0.0
    %296 = vmatpush1.xpose.msra.mxu0 0.0
    %297 = vmatprep.subr.mxu0 0.0
    %298 = vmatpush1.xpose.msra.mxu0 0.0
    %299 = vmatprep.subr.mxu0 0.0
    %300 = vmatpush1.xpose.msra.mxu0 0.0
    %301 = vmatprep.subr.mxu0 0.0
    %302 = vmatpush1.xpose.msra.mxu0 0.0
    %303 = vmatprep.subr.mxu0 0.0
    %304 = vmatpush1.xpose.msra.mxu0 0.0
    %305 = vmatprep.subr.mxu0 0.0
    %306 = vmatpush1.xpose.msra.mxu0 0.0
    %307 = vmatprep.subr.mxu0 0.0
    %308 = vmatpush1.xpose.msra.mxu0 0.0
    %309 = vmatprep.subr.mxu0 0.0
    %310 = vmatpush1.xpose.msra.mxu0 0.0
    %311 = vmatprep.subr.mxu0 0.0
    %312 = vmatpush1.xpose.msra.mxu0 0.0
    %313 = vmatprep.subr.mxu0 0.0
    %314 = vmatpush1.xpose.msra.mxu0 0.0
    %315 = vmatprep.subr.mxu0 0.0
    %316 = vmatpush1.xpose.msra.mxu0 0.0
    %317 = vmatprep.subr.mxu0 0.0
    %318 = vmatpush1.xpose.msra.mxu0 0.0
    %319 = vmatprep.subr.mxu0 0.0
    %320 = vmatpush1.xpose.msra.mxu0 0.0
    %321 = vmatprep.subr.mxu0 0.0
    %322 = vmatpush1.xpose.msra.mxu0 0.0
    %323 = vmatprep.subr.mxu0 0.0
    %324 = vmatpush1.xpose.msra.mxu0 0.0
    %325 = vmatprep.mubr.f32.mxu0 %v49
    %326 = vmatmul.mubr.f32.gmra.mrb[0].mxu0 %v48
    %v327 = vpop.f32.mrb[0].mxu0
    %v328 = vadd.f32 %v258, %v327
    %v329 = vpop.f32.mrb[0].mxu0
    %330 = vdwg.mxu0
    %v331 = vadd.f32 %v50, %v328
    %vm332 = vcmask 64512
    %333 = vst.msk [vmem:[#allocation2] sm:$0xff] %vm332, %v331
    // Predicated region
    $region22: #{tpu_custom_call.1} parent=1 // pred_check
      %p334 = pneg %p36
    $region23: #{tpu_custom_call.1} parent=1 // pred_check_branch
      %336 = sbr.rel (%p334) target = $region25
    $region24: #{tpu_custom_call.1} parent=1 // pred_region
      %v337 = vld [vmem:[#allocation2] sm:$0xff]
      %v338 = vlaneseq
      %v339 = vshrl.u32 %v338, 7
      %v340 = vlaneseq
      %v341 = vand.u32 %v340, 127
      %vm342 = vcmp.eq.s32.totalorder %v339, %v341
      %v343 = vsel %vm342, %v337, 0.0
      %v344 = vsel %vm332, %v343, 0.0
      %345 = vadd.xlane.f32.xlu0 %v344
      %v346 = vpop.xlane.xlu0 %345
      %v347 = vmul.f32 %v337, 2.0
      %v348 = vsub.f32 %v346, %v347
      %349 = vxpose.xlu0.b32.start [1/16] %v346, 128
      %350 = vxpose.xlu0.b32.cont [2/16] 0.0, 128
      %351 = vxpose.xlu0.b32.cont [3/16] 0.0, 128
      %352 = vxpose.xlu0.b32.cont [4/16] 0.0, 128
      %353 = vxpose.xlu0.b32.cont [5/16] 0.0, 128
      %354 = vxpose.xlu0.b32.cont [6/16] 0.0, 128
      %355 = vxpose.xlu0.b32.cont [7/16] 0.0, 128
      %356 = vxpose.xlu0.b32.cont [8/16] 0.0, 128
      %357 = vxpose.xlu0.b32.cont [9/16] 0.0, 128
      %358 = vxpose.xlu0.b32.cont [10/16] 0.0, 128
      %359 = vxpose.xlu0.b32.cont [11/16] 0.0, 128
      %360 = vxpose.xlu0.b32.cont [12/16] 0.0, 128
      %361 = vxpose.xlu0.b32.cont [13/16] 0.0, 128
      %362 = vxpose.xlu0.b32.cont [14/16] 0.0, 128
      %363 = vxpose.xlu0.b32.cont [15/16] 0.0, 128
      %364 = vxpose.xlu0.b32.end [16/16] 0.0, 128
      %v365 = vpop.trf.xlu0
      %v366 = vpop.trf.xlu0
      %v367 = vpop.trf.xlu0
      %v368 = vpop.trf.xlu0
      %v369 = vpop.trf.xlu0
      %v370 = vpop.trf.xlu0
      %v371 = vpop.trf.xlu0
      %v372 = vpop.trf.xlu0
      %v373 = vpop.trf.xlu0
      %v374 = vpop.trf.xlu0
      %v375 = vpop.trf.xlu0
      %v376 = vpop.trf.xlu0
      %v377 = vpop.trf.xlu0
      %v378 = vpop.trf.xlu0
      %v379 = vpop.trf.xlu0
      %v380 = vpop.trf.xlu0
      %v381 = vlaneseq
      %v382 = vshrl.u32 %v381, 7
      %v383 = vsub.s32 0, %v382
      %v384 = vrot.slane %v365, %v383
      %v385 = vadd.f32 %v348, %v384
      %v386 = vmax.f32 %v385, 1e-07
      %v387 = vrsqrt.pop %v386
      %v388 = vmul.f32 %v386, %v387
      %vm389 = vcmp.eq.f32.partialorder %v386, inf
      %v390 = vsel %vm389, %v386, %v388
      %vm391 = vcmp.eq.f32.partialorder %v386, 0.0
      %v392 = vand.u32 %v386, 2147483648
      %v393 = vsel %vm391, %v392, %v390
      %v394 = vld [vmem:[#allocation6] sm:$0xff]
      %vm395 = vcmask 261120
      %v397 = vsel %vm395, %v394, 0
      %399 = vmatprep.subr.mxu0 0.0
      %400 = vmatpush1.xpose.msra.mxu0 %v397
      %401 = vmatprep.subr.mxu0 0.0
      %402 = vmatpush1.xpose.msra.mxu0 0.0
      %403 = vmatprep.subr.mxu0 0.0
      %404 = vmatpush1.xpose.msra.mxu0 0.0
      %405 = vmatprep.subr.mxu0 0.0
      %406 = vmatpush1.xpose.msra.mxu0 0.0
      %407 = vmatprep.subr.mxu0 0.0
      %408 = vmatpush1.xpose.msra.mxu0 0.0
      %409 = vmatprep.subr.mxu0 0.0
      %410 = vmatpush1.xpose.msra.mxu0 0.0
      %411 = vmatprep.subr.mxu0 0.0
      %412 = vmatpush1.xpose.msra.mxu0 0.0
      %413 = vmatprep.subr.mxu0 0.0
      %414 = vmatpush1.xpose.msra.mxu0 0.0
      %415 = vmatprep.subr.mxu0 0.0
      %416 = vmatpush1.xpose.msra.mxu0 0.0
      %417 = vmatprep.subr.mxu0 0.0
      %418 = vmatpush1.xpose.msra.mxu0 0.0
      %419 = vmatprep.subr.mxu0 0.0
      %420 = vmatpush1.xpose.msra.mxu0 0.0
      %421 = vmatprep.subr.mxu0 0.0
      %422 = vmatpush1.xpose.msra.mxu0 0.0
      %423 = vmatprep.subr.mxu0 0.0
      %424 = vmatpush1.xpose.msra.mxu0 0.0
      %425 = vmatprep.subr.mxu0 0.0
      %426 = vmatpush1.xpose.msra.mxu0 0.0
      %427 = vmatprep.subr.mxu0 0.0
      %428 = vmatpush1.xpose.msra.mxu0 0.0
      %429 = vmatprep.subr.mxu0 0.0
      %430 = vmatpush1.xpose.msra.mxu0 0.0
      %431 = vmatprep.subr.mxu0 0.0
      %432 = vmatpush1.xpose.msra.mxu0 0.0
      %433 = vmatprep.subr.mxu0 0.0
      %434 = vmatpush1.xpose.msra.mxu0 0.0
      %435 = vmatprep.subr.mxu0 0.0
      %436 = vmatpush1.xpose.msra.mxu0 0.0
      %437 = vmatprep.subr.mxu0 0.0
      %438 = vmatpush1.xpose.msra.mxu0 0.0
      %439 = vmatprep.subr.mxu0 0.0
      %440 = vmatpush1.xpose.msra.mxu0 0.0
      %441 = vmatprep.subr.mxu0 0.0
      %442 = vmatpush1.xpose.msra.mxu0 0.0
      %443 = vmatprep.subr.mxu0 0.0
      %444 = vmatpush1.xpose.msra.mxu0 0.0
      %445 = vmatprep.subr.mxu0 0.0
      %446 = vmatpush1.xpose.msra.mxu0 0.0
      %447 = vmatprep.subr.mxu0 0.0
      %448 = vmatpush1.xpose.msra.mxu0 0.0
      %449 = vmatprep.subr.mxu0 0.0
      %450 = vmatpush1.xpose.msra.mxu0 0.0
      %451 = vmatprep.subr.mxu0 0.0
      %452 = vmatpush1.xpose.msra.mxu0 0.0
      %453 = vmatprep.subr.mxu0 0.0
      %454 = vmatpush1.xpose.msra.mxu0 0.0
      %455 = vmatprep.subr.mxu0 0.0
      %456 = vmatpush1.xpose.msra.mxu0 0.0
      %457 = vmatprep.subr.mxu0 0.0
      %458 = vmatpush1.xpose.msra.mxu0 0.0
      %459 = vmatprep.subr.mxu0 0.0
      %460 = vmatpush1.xpose.msra.mxu0 0.0
      %461 = vmatprep.subr.mxu0 0.0
      %462 = vmatpush1.xpose.msra.mxu0 0.0
      %463 = vmatprep.mubr.f32.mxu0 0.0
      %464 = vmatmul.mubr.f32.gmra.mrb[0].mxu0 %v397
      %v465 = vpop.f32.mrb[0].mxu0
      %v466 = vadd.f32 0.0, %v465
      %v467 = vpop.f32.mrb[0].mxu0
      %468 = vdwg.mxu0
      %v469 = vsel %vm342, %v466, 0.0
      %v470 = vsel %vm332, %v469, 0.0
      %471 = vadd.xlane.f32.xlu0 %v470
      %v472 = vpop.xlane.xlu0 %471
      %v473 = vmul.f32 %v466, 2.0
      %v474 = vsub.f32 %v472, %v473
      %475 = vxpose.xlu0.b32.start [1/16] %v472, 128
      %476 = vxpose.xlu0.b32.cont [2/16] 0.0, 128
      %477 = vxpose.xlu0.b32.cont [3/16] 0.0, 128
      %478 = vxpose.xlu0.b32.cont [4/16] 0.0, 128
      %479 = vxpose.xlu0.b32.cont [5/16] 0.0, 128
      %480 = vxpose.xlu0.b32.cont [6/16] 0.0, 128
      %481 = vxpose.xlu0.b32.cont [7/16] 0.0, 128
      %482 = vxpose.xlu0.b32.cont [8/16] 0.0, 128
      %483 = vxpose.xlu0.b32.cont [9/16] 0.0, 128
      %484 = vxpose.xlu0.b32.cont [10/16] 0.0, 128
      %485 = vxpose.xlu0.b32.cont [11/16] 0.0, 128
      %486 = vxpose.xlu0.b32.cont [12/16] 0.0, 128
      %487 = vxpose.xlu0.b32.cont [13/16] 0.0, 128
      %488 = vxpose.xlu0.b32.cont [14/16] 0.0, 128
      %489 = vxpose.xlu0.b32.cont [15/16] 0.0, 128
      %490 = vxpose.xlu0.b32.end [16/16] 0.0, 128
      %v491 = vpop.trf.xlu0
      %v492 = vpop.trf.xlu0
      %v493 = vpop.trf.xlu0
      %v494 = vpop.trf.xlu0
      %v495 = vpop.trf.xlu0
      %v496 = vpop.trf.xlu0
      %v497 = vpop.trf.xlu0
      %v498 = vpop.trf.xlu0
      %v499 = vpop.trf.xlu0
      %v500 = vpop.trf.xlu0
      %v501 = vpop.trf.xlu0
      %v502 = vpop.trf.xlu0
      %v503 = vpop.trf.xlu0
      %v504 = vpop.trf.xlu0
      %v505 = vpop.trf.xlu0
      %v506 = vpop.trf.xlu0
      %v507 = vlaneseq
      %v508 = vshrl.u32 %v507, 7
      %v509 = vsub.s32 0, %v508
      %v510 = vrot.slane %v491, %v509
      %v511 = vadd.f32 %v474, %v510
      %v512 = vmax.f32 %v511, 1e-07
      %v513 = vrsqrt.pop %v512
      %v514 = vmul.f32 %v512, %v513
      %vm515 = vcmp.eq.f32.partialorder %v512, inf
      %v516 = vsel %vm515, %v512, %v514
      %vm517 = vcmp.eq.f32.partialorder %v512, 0.0
      %v518 = vand.u32 %v512, 2147483648
      %v519 = vsel %vm517, %v518, %v516
      %v520 = vsel %vm332, %v393, 0.0
      %521 = vadd.xlane.f32.xlu0 %v520
      %v522 = vpop.xlane.xlu0 %521
      %v523 = vrcp.pop 8.0
      %v524 = vmul.f32 %v522, %v523
      %vm525 = vcmask 7168
      %v526 = vsel %vm525, %v524, 0.0
      %527 = vadd.xlane.f32.xlu0 %v526
      %v528 = vpop.xlane.xlu0 %527
      %v529 = vrot.slane %v528, 4
      %v530 = vadd.f32 %v528, %v529
      %v531 = vrot.slane %v530, 2
      %v532 = vadd.f32 %v530, %v531
      %v533 = vrot.slane %v532, 1
      %v534 = vadd.f32 %v532, %v533
      %s535 = vtos %v534
      %v536 = vrcp.pop 8.0
      %s537 = vtos %v536
      %s538 = smul.f32 %s535, %s537
      %v539 = vsub.f32 %v393, %v524
      %540 = vxpose.xlu0.b32.start [1/16] %v524, 128
      %541 = vxpose.xlu0.b32.cont [2/16] 0.0, 128
      %542 = vxpose.xlu0.b32.cont [3/16] 0.0, 128
      %543 = vxpose.xlu0.b32.cont [4/16] 0.0, 128
      %544 = vxpose.xlu0.b32.cont [5/16] 0.0, 128
      %545 = vxpose.xlu0.b32.cont [6/16] 0.0, 128
      %546 = vxpose.xlu0.b32.cont [7/16] 0.0, 128
      %547 = vxpose.xlu0.b32.cont [8/16] 0.0, 128
      %548 = vxpose.xlu0.b32.cont [9/16] 0.0, 128
      %549 = vxpose.xlu0.b32.cont [10/16] 0.0, 128
      %550 = vxpose.xlu0.b32.cont [11/16] 0.0, 128
      %551 = vxpose.xlu0.b32.cont [12/16] 0.0, 128
      %552 = vxpose.xlu0.b32.cont [13/16] 0.0, 128
      %553 = vxpose.xlu0.b32.cont [14/16] 0.0, 128
      %554 = vxpose.xlu0.b32.cont [15/16] 0.0, 128
      %555 = vxpose.xlu0.b32.end [16/16] 0.0, 128
      %v556 = vpop.trf.xlu0
      %v557 = vpop.trf.xlu0
      %v558 = vpop.trf.xlu0
      %v559 = vpop.trf.xlu0
      %v560 = vpop.trf.xlu0
      %v561 = vpop.trf.xlu0
      %v562 = vpop.trf.xlu0
      %v563 = vpop.trf.xlu0
      %v564 = vpop.trf.xlu0
      %v565 = vpop.trf.xlu0
      %v566 = vpop.trf.xlu0
      %v567 = vpop.trf.xlu0
      %v568 = vpop.trf.xlu0
      %v569 = vpop.trf.xlu0
      %v570 = vpop.trf.xlu0
      %v571 = vpop.trf.xlu0
      %v572 = vlaneseq
      %v573 = vshrl.u32 %v572, 7
      %v574 = vsub.s32 0, %v573
      %v575 = vrot.slane %v556, %v574
      %v576 = vsub.f32 %v539, %v575
      %v577 = vstv %s538
      %v578 = vadd.f32 %v576, %v577
      %v579 = vsel %vm332, %v519, 0.0
      %580 = vadd.xlane.f32.xlu0 %v579
      %v581 = vpop.xlane.xlu0 %580
      %v582 = vmul.f32 %v581, %v523
      %v583 = vsel %vm525, %v582, 0.0
      %584 = vadd.xlane.f32.xlu0 %v583
      %v585 = vpop.xlane.xlu0 %584
      %v586 = vrot.slane %v585, 4
      %v587 = vadd.f32 %v585, %v586
      %v588 = vrot.slane %v587, 2
      %v589 = vadd.f32 %v587, %v588
      %v590 = vrot.slane %v589, 1
      %v591 = vadd.f32 %v589, %v590
      %s592 = vtos %v591
      %v593 = vrcp.pop 8.0
      %s594 = vtos %v593
      %s595 = smul.f32 %s592, %s594
      %v596 = vsub.f32 %v519, %v582
      %597 = vxpose.xlu0.b32.start [1/16] %v582, 128
      %598 = vxpose.xlu0.b32.cont [2/16] 0.0, 128
      %599 = vxpose.xlu0.b32.cont [3/16] 0.0, 128
      %600 = vxpose.xlu0.b32.cont [4/16] 0.0, 128
      %601 = vxpose.xlu0.b32.cont [5/16] 0.0, 128
      %602 = vxpose.xlu0.b32.cont [6/16] 0.0, 128
      %603 = vxpose.xlu0.b32.cont [7/16] 0.0, 128
      %604 = vxpose.xlu0.b32.cont [8/16] 0.0, 128
      %605 = vxpose.xlu0.b32.cont [9/16] 0.0, 128
      %606 = vxpose.xlu0.b32.cont [10/16] 0.0, 128
      %607 = vxpose.xlu0.b32.cont [11/16] 0.0, 128
      %608 = vxpose.xlu0.b32.cont [12/16] 0.0, 128
      %609 = vxpose.xlu0.b32.cont [13/16] 0.0, 128
      %610 = vxpose.xlu0.b32.cont [14/16] 0.0, 128
      %611 = vxpose.xlu0.b32.cont [15/16] 0.0, 128
      %612 = vxpose.xlu0.b32.end [16/16] 0.0, 128
      %v613 = vpop.trf.xlu0
      %v614 = vpop.trf.xlu0
      %v615 = vpop.trf.xlu0
      %v616 = vpop.trf.xlu0
      %v617 = vpop.trf.xlu0
      %v618 = vpop.trf.xlu0
      %v619 = vpop.trf.xlu0
      %v620 = vpop.trf.xlu0
      %v621 = vpop.trf.xlu0
      %v622 = vpop.trf.xlu0
      %v623 = vpop.trf.xlu0
      %v624 = vpop.trf.xlu0
      %v625 = vpop.trf.xlu0
      %v626 = vpop.trf.xlu0
      %v627 = vpop.trf.xlu0
      %v628 = vpop.trf.xlu0
      %v629 = vlaneseq
      %v630 = vshrl.u32 %v629, 7
      %v631 = vsub.s32 0, %v630
      %v632 = vrot.slane %v613, %v631
      %v633 = vsub.f32 %v596, %v632
      %v634 = vstv %s595
      %v635 = vadd.f32 %v633, %v634
      %v636 = vmul.f32 %v578, %v635
      %v637 = vsel %vm332, %v636, 0.0
      %638 = vadd.xlane.f32.xlu0 %v637
      %v639 = vpop.xlane.xlu0 %638
      %v640 = vrot.slane %v639, 4
      %v641 = vadd.f32 %v639, %v640
      %v642 = vrot.slane %v641, 2
      %v643 = vadd.f32 %v641, %v642
      %v644 = vrot.slane %v643, 1
      %v645 = vadd.f32 %v643, %v644
      %s646 = vtos %v645
      %v647 = vmul.f32 %v578, %v578
      %v648 = vsel %vm332, %v647, 0.0
      %649 = vadd.xlane.f32.xlu0 %v648
      %v650 = vpop.xlane.xlu0 %649
      %v651 = vrot.slane %v650, 4
      %v652 = vadd.f32 %v650, %v651
      %v653 = vrot.slane %v652, 2
      %v654 = vadd.f32 %v652, %v653
      %v655 = vrot.slane %v654, 1
      %v656 = vadd.f32 %v654, %v655
      %s657 = vtos %v656
      %v658 = vmul.f32 %v635, %v635
      %v659 = vsel %vm332, %v658, 0.0
      %660 = vadd.xlane.f32.xlu0 %v659
      %v661 = vpop.xlane.xlu0 %660
      %v662 = vrot.slane %v661, 4
      %v663 = vadd.f32 %v661, %v662
      %v664 = vrot.slane %v663, 2
      %v665 = vadd.f32 %v663, %v664
      %v666 = vrot.slane %v665, 1
      %v667 = vadd.f32 %v665, %v666
      %s668 = vtos %v667
      %s669 = smul.f32 %s646, 0.015625
      %s670 = sadd.f32 %s669, 1e-07
      %v671 = vstv %s670
      %v672 = vrsqrt.pop %v671
      %v673 = vmul.f32 %v671, %v672
      %vm674 = vcmp.eq.f32.partialorder %v671, inf
      %v675 = vsel %vm674, %v671, %v673
      %vm676 = vcmp.eq.f32.partialorder %v671, 0.0
      %v677 = vand.u32 %v671, 2147483648
      %v678 = vsel %vm676, %v677, %v675
      %s679 = vtos %v678
      %s680 = smul.f32 %s657, 0.015625
      %s681 = sadd.f32 %s680, 1e-07
      %v682 = vstv %s681
      %v683 = vrsqrt.pop %v682
      %v684 = vmul.f32 %v682, %v683
      %vm685 = vcmp.eq.f32.partialorder %v682, inf
      %v686 = vsel %vm685, %v682, %v684
      %vm687 = vcmp.eq.f32.partialorder %v682, 0.0
      %v688 = vand.u32 %v682, 2147483648
      %v689 = vsel %vm687, %v688, %v686
      %s690 = vtos %v689
      %s691 = smul.f32 %s668, 0.015625
      %s692 = sadd.f32 %s691, 1e-07
      %v693 = vstv %s692
      %v694 = vrsqrt.pop %v693
      %v695 = vmul.f32 %v693, %v694
      %vm696 = vcmp.eq.f32.partialorder %v693, inf
      %v697 = vsel %vm696, %v693, %v695
      %vm698 = vcmp.eq.f32.partialorder %v693, 0.0
      %v699 = vand.u32 %v693, 2147483648
      %v700 = vsel %vm698, %v699, %v697
      %s701 = vtos %v700
      %s702 = sadd.f32 %s690, 1e-07
      %v703 = vstv %s702
      %v704 = vrsqrt.pop %v703
      %v705 = vmul.f32 %v703, %v704
      %vm706 = vcmp.eq.f32.partialorder %v703, inf
      %v707 = vsel %vm706, %v703, %v705
      %vm708 = vcmp.eq.f32.partialorder %v703, 0.0
      %v709 = vand.u32 %v703, 2147483648
      %v710 = vsel %vm708, %v709, %v707
      %s711 = vtos %v710
      %s712 = sadd.f32 %s701, 1e-07
      %v713 = vstv %s712
      %v714 = vrsqrt.pop %v713
      %v715 = vmul.f32 %v713, %v714
      %vm716 = vcmp.eq.f32.partialorder %v713, inf
      %v717 = vsel %vm716, %v713, %v715
      %vm718 = vcmp.eq.f32.partialorder %v713, 0.0
      %v719 = vand.u32 %v713, 2147483648
      %v720 = vsel %vm718, %v719, %v717
      %s721 = vtos %v720
      %s722 = smul.f32 %s711, %s721
      %v723 = vstv %s722
      %v724 = vrcp.pop %v723
      %s725 = vtos %v724
      %s726 = smul.f32 %s679, %s725
      %s727 = scalar_lea.smem [#allocation8], 0
      %728 = sst [smem:[%s727]] %s726
    $region25: #{tpu_custom_call.1} parent=1 // pred_fallthru
      _
    // Predicated region
    $region26: #{tpu_custom_call.1} parent=1 // pred_check
      _
    $region27: #{tpu_custom_call.1} parent=1 // pred_check_branch
      %730 = sbr.rel (0) target = $region29
    $region28: #{tpu_custom_call.1} parent=1 // pred_region
      %s732 = ssub.s32 16, 16
      %733 = vsyncadd [#allocation5], %s732
      %736 = dma.smem_to_hbm [#allocation8], 16, %s2, [#allocation5]
    $region29: #{tpu_custom_call.1} parent=1 // pred_fallthru
      _
    // Predicated region
    $region30: #{tpu_custom_call.1} parent=1 // pred_check
      _
    $region31: #{tpu_custom_call.1} parent=1 // pred_check_branch
      %738 = sbr.rel (0) target = $region33
    $region32: #{tpu_custom_call.1} parent=1 // pred_region
      %739 = dma.done [#allocation5], 16
    $region33: #{tpu_custom_call.1} parent=1 // pred_fallthru
      _
    %740 = sfence
    %741 = vsyncpa [#allocation4], 1
    %742 = vsyncpa [#allocation7], 1
    %743 = vsyncpa [#allocation5], 1

</llo_original>
